<compile_context>
chip_gen: v7x
topology: tpu7x:2x2x1
jax: 0.10.0
libtpu: 0.0.40
codegen_flags: <defaults>
</compile_context>

<pallas_src>
import functools

import jax
import jax.numpy as jnp
from jax.experimental import pallas as pl
from jax.experimental.pallas import tpu as pltpu

_LANES = 128  # lane width; hidden (30) and actions (A) are padded to this


def _round_up(n, m):
    return ((n + m - 1) // m) * m


def _cdiv(a, b):
    return -(-a // b)


def _make_policy_kernel(f_pad):
    """Kernel over one (TB, F_pad) activation tile with the packed param slab.

    Param slab row layout (all 128 lanes wide, zero padded):
      [0,            f_pad)        : w1   (F rows real, 30 cols real)
      [f_pad,        f_pad + 8)    : b1   (row f_pad real)
      [f_pad + 8,    f_pad + 136)  : w2   (30 rows real, A cols real)
      [f_pad + 136,  f_pad + 144)  : b2   (row f_pad + 136 real)
    All slice starts are multiples of 8 (sublane-aligned static slices).
    """
    w2_row = f_pad + 8
    b2_row = f_pad + 136

    def kernel(x_ref, p_ref, o_ref):
        x = x_ref[...]                                     # (TB, F_pad)
        w1 = p_ref[0:f_pad, :]                             # (F_pad, 128)
        b1 = p_ref[f_pad:f_pad + 1, :]                     # (1, 128)
        w2 = p_ref[w2_row:w2_row + _LANES, :]              # (128, 128)
        b2 = p_ref[b2_row:b2_row + 1, :]                   # (1, 128)

        h = jnp.dot(x, w1, preferred_element_type=jnp.float32) + b1
        h = jnp.maximum(h, 0.0)                            # ReLU (padded cols stay 0)
        y = jnp.dot(h, w2, preferred_element_type=jnp.float32) + b2
        o_ref[...] = jnp.tanh(y) * 2.0                     # actions in [-2, 2]

    return kernel


def pack_policy_params(w1, b1, w2, b2):
    """Pack (F,H) w1, (1,H) b1, (H,A) w2, (1,A) b2 into one (F_pad+144, 128) slab.

    Weights are stored (in_features, out_features), i.e. transposed vs PyTorch,
    so the kernel computes x @ W + b.
    """
    F, H = w1.shape
    H2, A = w2.shape
    assert H == H2 and H <= _LANES and A <= _LANES
    f_pad = _round_up(F, 8)
    slab = jnp.zeros((f_pad + 144, _LANES), jnp.float32)
    slab = slab.at[:F, :H].set(w1.astype(jnp.float32))
    slab = slab.at[f_pad, :H].set(jnp.reshape(b1, (-1,)).astype(jnp.float32))
    slab = slab.at[f_pad + 8:f_pad + 8 + H, :A].set(w2.astype(jnp.float32))
    slab = slab.at[f_pad + 136, :A].set(jnp.reshape(b2, (-1,)).astype(jnp.float32))
    return slab


def _choose_batch_tiling(B, tile_b):
    """Pick (tile rows, padded batch). Tiles are chosen from the tile *count*
    first so padding never rounds up a whole extra tile (<= 7 pad rows/tile)."""
    n_tiles = _cdiv(B, tile_b)
    # v7x has 2 TensorCores: once there is enough work, keep >= 2 "parallel"
    # tiles so both cores get a share; small batches stay on a single tile.
    if n_tiles == 1 and B > 1024:
        n_tiles = 2
    tb = _round_up(_cdiv(B, n_tiles), 8)
    bp = n_tiles * tb
    return tb, bp


@functools.partial(jax.jit, static_argnames=("n_actions", "tile_b"))
def policy_forward(x, params_slab, n_actions, *, tile_b=1024):
    B, F = x.shape
    f_pad = _round_up(F, 8)
    assert params_slab.shape == (f_pad + 144, _LANES)

    tb, bp = _choose_batch_tiling(B, tile_b)

    if bp == B and f_pad == F and x.dtype == jnp.float32:
        # Already tile/sublane aligned: pass through, no extra HBM round trip.
        x_in = x
    else:
        # Minimal zero-pad (<= 7 rows per tile + feature pad to a multiple of 8).
        x_in = jnp.zeros((bp, f_pad), jnp.float32).at[:B, :F].set(
            x.astype(jnp.float32))

    kernel = _make_policy_kernel(f_pad)
    flops = 2 * bp * (f_pad * _LANES + _LANES * _LANES)
    bytes_accessed = int(bp * f_pad * 4 + params_slab.size * 4 + bp * _LANES * 4)

    out = pl.pallas_call(
        kernel,
        out_shape=jax.ShapeDtypeStruct((bp, _LANES), jnp.float32),
        grid_spec=pltpu.PrefetchScalarGridSpec(
            num_scalar_prefetch=0,
            grid=(bp // tb,),
            in_specs=[
                # activations: pipelined over the batch grid
                pl.BlockSpec((tb, f_pad), lambda i: (i, 0)),
                # packed parameters: constant block index -> one DMA, VMEM-resident
                pl.BlockSpec(params_slab.shape, lambda i: (0, 0)),
            ],
            # lane-dense (TB, 128) output slab -> unmasked stores
            out_specs=pl.BlockSpec((tb, _LANES), lambda i: (i, 0)),
        ),
        compiler_params=pltpu.CompilerParams(
            dimension_semantics=("parallel",)),
        cost_estimate=pl.CostEstimate(
            flops=flops,
            transcendentals=bp * _LANES,
            bytes_accessed=bytes_accessed),
    )(x_in, params_slab)

    return out[:B, :n_actions]


def init_params(key, n_features, n_actions, hidden=30):
    # Deterministic synthetic init mirroring the module:
    # weights ~ N(0, 0.1) (weight.data.normal_(0, 0.1)),
    # biases ~ U(-1/sqrt(fan_in), 1/sqrt(fan_in)) (PyTorch Linear default).
    k1, k2, k3, k4 = jax.random.split(key, 4)
    w1 = 0.1 * jax.random.normal(k1, (n_features, hidden), jnp.float32)
    b1 = jax.random.uniform(k2, (1, hidden), jnp.float32,
                            minval=-1.0 / jnp.sqrt(n_features),
                            maxval=1.0 / jnp.sqrt(n_features))
    w2 = 0.1 * jax.random.normal(k3, (hidden, n_actions), jnp.float32)
    b2 = jax.random.uniform(k4, (1, n_actions), jnp.float32,
                            minval=-1.0 / jnp.sqrt(hidden),
                            maxval=1.0 / jnp.sqrt(hidden))
    return w1, b1, w2, b2


def _reference(x, w1, b1, w2, b2):
    return jnp.tanh(jnp.maximum(x @ w1 + b1, 0.0) @ w2 + b2) * 2.0


if __name__ == "__main__":
    key = jax.random.PRNGKey(0)
    kx, kp, kx2, kp2 = jax.random.split(key, 4)

    # --- case 1: small aligned batch (single tile, no wrapper-side copy) ---
    n_features, n_actions, batch = 16, 4, 8
    x = jax.random.normal(kx, (batch, n_features), jnp.float32)
    w1, b1, w2, b2 = init_params(kp, n_features, n_actions)
    slab = pack_policy_params(w1, b1, w2, b2)
    actions = jax.block_until_ready(policy_forward(x, slab, n_actions))
    ref = _reference(x, w1, b1, w2, b2)
    assert actions.shape == (batch, n_actions)
    assert jnp.allclose(actions, ref, atol=1e-5, rtol=1e-5)

    # --- case 2: larger aligned batch (one 512-row tile, x passed through) ---
    xb = jax.random.normal(kx, (512, n_features), jnp.float32)
    actions_b = jax.block_until_ready(policy_forward(xb, slab, n_actions))
    assert actions_b.shape == (512, n_actions)
    assert jnp.allclose(actions_b, _reference(xb, w1, b1, w2, b2),
                        atol=1e-5, rtol=1e-5)

    # --- case 3: large ragged batch (3 parallel tiles of 704, 12 pad rows) ---
    xc = jax.random.normal(kx2, (2100, n_features), jnp.float32)
    actions_c = jax.block_until_ready(policy_forward(xc, slab, n_actions))
    assert actions_c.shape == (2100, n_actions)
    assert jnp.allclose(actions_c, _reference(xc, w1, b1, w2, b2),
                        atol=1e-5, rtol=1e-5)

    # --- case 4: n_features not a multiple of 8 (feature + batch pad path) ---
    n_features2, n_actions2, batch2 = 10, 4, 7
    x2 = jax.random.normal(kx2, (batch2, n_features2), jnp.float32)
    p2 = init_params(kp2, n_features2, n_actions2)
    slab2 = pack_policy_params(*p2)
    a2 = jax.block_until_ready(policy_forward(x2, slab2, n_actions2))
    assert a2.shape == (batch2, n_actions2)
    assert jnp.allclose(a2, _reference(x2, *p2), atol=1e-5, rtol=1e-5)

    print("KERNEL_OK")
</pallas_src>

<mosaic_0001>
module attributes {stable_mosaic.version = 11 : i64} {
  func.func @kernel(%arg0: i32, %arg1: memref<8x16xf32, #tpu.memory_space<vmem>>, %arg2: memref<160x128xf32, #tpu.memory_space<vmem>>, %arg3: memref<8x128xf32, #tpu.memory_space<vmem>>) attributes {dimension_semantics = [#tpu.dimension_semantics<parallel>], iteration_bounds = array<i64: 1>, scalar_prefetch = 0 : i64, scratch_operands = 0 : i64, tpu.core_type = #tpu.core_type<tc>, window_params = [{transform_indices = @transform_0, window_bounds = array<i64: 8, 16>}, {pipeline_mode = #tpu.pipeline_mode<synchronous>, transform_indices = @transform_1, window_bounds = array<i64: 160, 128>}, {transform_indices = @transform_2, window_bounds = array<i64: 8, 128>}]} {
    %c0 = arith.constant 0 : index
    %c0_0 = arith.constant 0 : index
    %0 = vector.load %arg1[%c0, %c0_0] : memref<8x16xf32, #tpu.memory_space<vmem>>, vector<8x16xf32>
    %c0_1 = arith.constant 0 : index
    %c0_2 = arith.constant 0 : index
    %1 = vector.load %arg2[%c0_1, %c0_2] : memref<160x128xf32, #tpu.memory_space<vmem>>, vector<16x128xf32>
    %c16 = arith.constant 16 : index
    %c0_3 = arith.constant 0 : index
    %2 = vector.load %arg2[%c16, %c0_3] : memref<160x128xf32, #tpu.memory_space<vmem>>, vector<1x128xf32>
    %c24 = arith.constant 24 : index
    %c0_4 = arith.constant 0 : index
    %3 = vector.load %arg2[%c24, %c0_4] : memref<160x128xf32, #tpu.memory_space<vmem>>, vector<128x128xf32>
    %c152 = arith.constant 152 : index
    %c0_5 = arith.constant 0 : index
    %4 = vector.load %arg2[%c152, %c0_5] : memref<160x128xf32, #tpu.memory_space<vmem>>, vector<1x128xf32>
    %cst = arith.constant dense<0.000000e+00> : vector<8x128xf32>
    %5 = tpu.matmul %0, %1, %cst {dimension_numbers = #tpu.dot_dimension_numbers<[1], [0], [0], [1], [0, 0, 1, 1], [], []>} : vector<8x16xf32>, vector<16x128xf32>, vector<8x128xf32> -> vector<8x128xf32>
    %6 = vector.broadcast %2 : vector<1x128xf32> to vector<8x128xf32>
    %7 = arith.addf %5, %6 : vector<8x128xf32>
    %cst_6 = arith.constant 0.000000e+00 : f32
    %8 = vector.broadcast %cst_6 : f32 to vector<8x128xf32>
    %9 = arith.maximumf %7, %8 : vector<8x128xf32>
    %cst_7 = arith.constant dense<0.000000e+00> : vector<8x128xf32>
    %10 = tpu.matmul %9, %3, %cst_7 {dimension_numbers = #tpu.dot_dimension_numbers<[1], [0], [0], [1], [0, 0, 1, 1], [], []>} : vector<8x128xf32>, vector<128x128xf32>, vector<8x128xf32> -> vector<8x128xf32>
    %11 = vector.broadcast %4 : vector<1x128xf32> to vector<8x128xf32>
    %12 = arith.addf %10, %11 : vector<8x128xf32>
    %13 = math.tanh %12 : vector<8x128xf32>
    %cst_8 = arith.constant 2.000000e+00 : f32
    %14 = vector.broadcast %cst_8 : f32 to vector<8x128xf32>
    %15 = arith.mulf %13, %14 : vector<8x128xf32>
    %c0_9 = arith.constant 0 : index
    %c0_10 = arith.constant 0 : index
    %16 = vector.load %arg3[%c0_9, %c0_10] : memref<8x128xf32, #tpu.memory_space<vmem>>, vector<8x128xf32>
    tpu.vector_store %arg3[%c0_9, %c0_10], %15 {strides = array<i32>} : memref<8x128xf32, #tpu.memory_space<vmem>>, vector<8x128xf32>,
    return
  }
  func.func @transform_0(%arg0: i32) -> (i32, i32) {
    %c0_i32 = arith.constant 0 : i32
    %c0_i32_0 = arith.constant 0 : i32
    return %arg0, %c0_i32 : i32, i32
  }
  func.func @transform_1(%arg0: i32) -> (i32, i32) {
    %c0_i32 = arith.constant 0 : i32
    %c0_i32_0 = arith.constant 0 : i32
    %c0_i32_1 = arith.constant 0 : i32
    return %c0_i32, %c0_i32_0 : i32, i32
  }
  func.func @transform_2(%arg0: i32) -> (i32, i32) {
    %c0_i32 = arith.constant 0 : i32
    %c0_i32_0 = arith.constant 0 : i32
    return %arg0, %c0_i32 : i32, i32
  }
}

</mosaic_0001>

<llo_original>
// kernel: policy_forward.1
$region0: #{policy_forward.1}
  #allocation0 [shape = 'u32[]', space=smem, size = 0x4, offset = 0x4, fixed_abs, tag = 'smem constant byte address 0x4 - core index']
  #allocation1 [shape = 'u32[144,128]{1,0:T(1,128)}', space=vmem, size = 0x12000, scoped, tag = 'internal scratch']
  %s0 = inlined_call_operand.hbm [shape: f32[8,16], index: 0, kind: input, shape index: {}]
  %s1 = inlined_call_operand.hbm [shape: f32[160,128], index: 1, kind: input, shape index: {}]
  %s2 = inlined_call_operand.vmem [shape: f32[8,128], index: 2, kind: output, shape index: {}]
  %s3 = sld [smem:[#allocation0]]
  $region26: #{policy_forward.1} parent=0
    _
  %s5 = ssub.s32 1, %s3
  %s6 = scalar_select 0, %s5, %s3
  $region1: #{policy_forward.1} parent=0
    #allocation2 [shape = 'u8[4096]{0}', space=vmem, size = 0x1000, scoped, tag = 'input window, operand 0, single buffered']
    #allocation3 [shape = 's32[1]{0}', space=sflag, size = 0x4, scoped, tag = 'scoped memory for policy_forward.1']
    #allocation4 [shape = 'u8[81920]{0}', space=vmem, size = 0x14000, scoped, tag = 'input window, operand 1, single buffered']
    #allocation5 [shape = 's32[1]{0}', space=sflag, size = 0x4, scoped, tag = 'scoped memory for policy_forward.1']
    %7 = vsyncpa [#allocation3], 0
    %8 = vsyncpa [#allocation5], 0
    // Predicated region
    $region2: #{policy_forward.1} parent=1 // pred_check
      _
    $region3: #{policy_forward.1} parent=1 // pred_check_branch
      %10 = sbr.rel (0) target = $region5
    $region4: #{policy_forward.1} parent=1 // pred_region
      %s12 = ssub.s32 128, 128
      %13 = vsyncadd [#allocation3], %s12
      %s15 = sshll.u32 [#allocation2], 4
      %s16 = int_to_ptr.vmem [resolvable:$true] %s15
      %18 = dma.hbm_to_vmem [thread:$0]  %s0, 128, %s16, [#allocation3]
    $region5: #{policy_forward.1} parent=1 // pred_fallthru
      _
    // Predicated region
    $region6: #{policy_forward.1} parent=1 // pred_check
      _
    $region7: #{policy_forward.1} parent=1 // pred_check_branch
      %20 = sbr.rel (0) target = $region9
    $region8: #{policy_forward.1} parent=1 // pred_region
      %s22 = ssub.s32 2560, 2560
      %23 = vsyncadd [#allocation5], %s22
      %s24 = sshll.u32 [#allocation4], 4
      %s25 = int_to_ptr.vmem [resolvable:$true] %s24
      %30 = dma.hbm_to_vmem [thread:$0]  %s1, 2560, %s25, [#allocation5], 128, 128, 8
    $region9: #{policy_forward.1} parent=1 // pred_fallthru
      _
    // Predicated region
    $region10: #{policy_forward.1} parent=1 // pred_check
      _
    $region11: #{policy_forward.1} parent=1 // pred_check_branch
      %32 = sbr.rel (0) target = $region13
    $region12: #{policy_forward.1} parent=1 // pred_region
      %33 = dma.done [#allocation3], 128
    $region13: #{policy_forward.1} parent=1 // pred_fallthru
      _
    // Predicated region
    $region14: #{policy_forward.1} parent=1 // pred_check
      _
    $region15: #{policy_forward.1} parent=1 // pred_check_branch
      %35 = sbr.rel (0) target = $region17
    $region16: #{policy_forward.1} parent=1 // pred_region
      %36 = dma.done [#allocation5], 2560
    $region17: #{policy_forward.1} parent=1 // pred_fallthru
      _
    %v37 = vld [vmem:[#allocation2] sm:$0xff]
    %v38 = vld [vmem:[#allocation4] sm:$0xff]
    %v39 = vld [vmem:[#allocation4 + $0x8] sm:$0xff]
    %v40 = vld [vmem:[#allocation4 + $0x10] sm:$0x1]
    %v41 = vld [vmem:[#allocation4 + $0x18] sm:$0xff]
    %v42 = vld [vmem:[#allocation4 + $0x20] sm:$0xff]
    %v43 = vld [vmem:[#allocation4 + $0x28] sm:$0xff]
    %v44 = vld [vmem:[#allocation4 + $0x30] sm:$0xff]
    %v45 = vld [vmem:[#allocation4 + $0x38] sm:$0xff]
    %v46 = vld [vmem:[#allocation4 + $0x40] sm:$0xff]
    %v47 = vld [vmem:[#allocation4 + $0x48] sm:$0xff]
    %v48 = vld [vmem:[#allocation4 + $0x50] sm:$0xff]
    %v49 = vld [vmem:[#allocation4 + $0x58] sm:$0xff]
    %v50 = vld [vmem:[#allocation4 + $0x60] sm:$0xff]
    %v51 = vld [vmem:[#allocation4 + $0x68] sm:$0xff]
    %v52 = vld [vmem:[#allocation4 + $0x70] sm:$0xff]
    %v53 = vld [vmem:[#allocation4 + $0x78] sm:$0xff]
    %v54 = vld [vmem:[#allocation4 + $0x80] sm:$0xff]
    %v55 = vld [vmem:[#allocation4 + $0x88] sm:$0xff]
    %v56 = vld [vmem:[#allocation4 + $0x90] sm:$0xff]
    %v57 = vld [vmem:[#allocation4 + $0x98] sm:$0x1]
    %v58 = vlaneseq
    %v59 = vshrl.u32 %v58, 7
    %v60 = vsub.s32 0, %v59
    %v61 = vrot.slane %v40, %v60
    %vm62 = vcmask 130048
    %v64 = vsel %vm62, %v37, 0
    %66 = vmatprep.subr.mxu0 0.0
    %67 = vmatpush1.msra.mxu0 %v38
    %68 = vmatprep.subr.mxu0 0.0
    %69 = vmatpush1.msra.mxu0 %v39
    %70 = vmatprep.subr.mxu0 0.0
    %71 = vmatpush1.msra.mxu0 0.0
    %72 = vmatprep.subr.mxu0 0.0
    %73 = vmatpush1.msra.mxu0 0.0
    %74 = vmatprep.subr.mxu0 0.0
    %75 = vmatpush1.msra.mxu0 0.0
    %76 = vmatprep.subr.mxu0 0.0
    %77 = vmatpush1.msra.mxu0 0.0
    %78 = vmatprep.subr.mxu0 0.0
    %79 = vmatpush1.msra.mxu0 0.0
    %80 = vmatprep.subr.mxu0 0.0
    %81 = vmatpush1.msra.mxu0 0.0
    %82 = vmatprep.subr.mxu0 0.0
    %83 = vmatpush1.msra.mxu0 0.0
    %84 = vmatprep.subr.mxu0 0.0
    %85 = vmatpush1.msra.mxu0 0.0
    %86 = vmatprep.subr.mxu0 0.0
    %87 = vmatpush1.msra.mxu0 0.0
    %88 = vmatprep.subr.mxu0 0.0
    %89 = vmatpush1.msra.mxu0 0.0
    %90 = vmatprep.subr.mxu0 0.0
    %91 = vmatpush1.msra.mxu0 0.0
    %92 = vmatprep.subr.mxu0 0.0
    %93 = vmatpush1.msra.mxu0 0.0
    %94 = vmatprep.subr.mxu0 0.0
    %95 = vmatpush1.msra.mxu0 0.0
    %96 = vmatprep.subr.mxu0 0.0
    %97 = vmatpush1.msra.mxu0 0.0
    %98 = vmatprep.subr.mxu0 0.0
    %99 = vmatpush1.msra.mxu0 0.0
    %100 = vmatprep.subr.mxu0 0.0
    %101 = vmatpush1.msra.mxu0 0.0
    %102 = vmatprep.subr.mxu0 0.0
    %103 = vmatpush1.msra.mxu0 0.0
    %104 = vmatprep.subr.mxu0 0.0
    %105 = vmatpush1.msra.mxu0 0.0
    %106 = vmatprep.subr.mxu0 0.0
    %107 = vmatpush1.msra.mxu0 0.0
    %108 = vmatprep.subr.mxu0 0.0
    %109 = vmatpush1.msra.mxu0 0.0
    %110 = vmatprep.subr.mxu0 0.0
    %111 = vmatpush1.msra.mxu0 0.0
    %112 = vmatprep.subr.mxu0 0.0
    %113 = vmatpush1.msra.mxu0 0.0
    %114 = vmatprep.subr.mxu0 0.0
    %115 = vmatpush1.msra.mxu0 0.0
    %116 = vmatprep.subr.mxu0 0.0
    %117 = vmatpush1.msra.mxu0 0.0
    %118 = vmatprep.subr.mxu0 0.0
    %119 = vmatpush1.msra.mxu0 0.0
    %120 = vmatprep.subr.mxu0 0.0
    %121 = vmatpush1.msra.mxu0 0.0
    %122 = vmatprep.subr.mxu0 0.0
    %123 = vmatpush1.msra.mxu0 0.0
    %124 = vmatprep.subr.mxu0 0.0
    %125 = vmatpush1.msra.mxu0 0.0
    %126 = vmatprep.subr.mxu0 0.0
    %127 = vmatpush1.msra.mxu0 0.0
    %128 = vmatprep.subr.mxu0 0.0
    %129 = vmatpush1.msra.mxu0 0.0
    %130 = vmatprep.mubr.f32.mxu0 0.0
    %131 = vmatmul.mubr.f32.gmra.mrb[0].mxu0 %v64
    %v132 = vpop.f32.mrb[0].mxu0
    %v133 = vadd.f32 %v61, %v132
    %v134 = vpop.f32.mrb[0].mxu0
    %135 = vdwg.mxu0
    %v136 = vmax.f32 %v133, 0.0
    %v137 = vlaneseq
    %v138 = vshrl.u32 %v137, 7
    %v139 = vsub.s32 0, %v138
    %v140 = vrot.slane %v57, %v139
    %141 = vmatprep.subr.mxu0 0.0
    %142 = vmatpush1.msra.mxu0 %v41
    %143 = vmatprep.subr.mxu0 0.0
    %144 = vmatpush1.msra.mxu0 %v42
    %145 = vmatprep.subr.mxu0 0.0
    %146 = vmatpush1.msra.mxu0 %v43
    %147 = vmatprep.subr.mxu0 0.0
    %148 = vmatpush1.msra.mxu0 %v44
    %149 = vmatprep.subr.mxu0 0.0
    %150 = vmatpush1.msra.mxu0 %v45
    %151 = vmatprep.subr.mxu0 0.0
    %152 = vmatpush1.msra.mxu0 %v46
    %153 = vmatprep.subr.mxu0 0.0
    %154 = vmatpush1.msra.mxu0 %v47
    %155 = vmatprep.subr.mxu0 0.0
    %156 = vmatpush1.msra.mxu0 %v48
    %157 = vmatprep.subr.mxu0 0.0
    %158 = vmatpush1.msra.mxu0 %v49
    %159 = vmatprep.subr.mxu0 0.0
    %160 = vmatpush1.msra.mxu0 %v50
    %161 = vmatprep.subr.mxu0 0.0
    %162 = vmatpush1.msra.mxu0 %v51
    %163 = vmatprep.subr.mxu0 0.0
    %164 = vmatpush1.msra.mxu0 %v52
    %165 = vmatprep.subr.mxu0 0.0
    %166 = vmatpush1.msra.mxu0 %v53
    %167 = vmatprep.subr.mxu0 0.0
    %168 = vmatpush1.msra.mxu0 %v54
    %169 = vmatprep.subr.mxu0 0.0
    %170 = vmatpush1.msra.mxu0 %v55
    %171 = vmatprep.subr.mxu0 0.0
    %172 = vmatpush1.msra.mxu0 %v56
    %173 = vmatprep.subr.mxu0 0.0
    %174 = vmatpush1.msra.mxu0 0.0
    %175 = vmatprep.subr.mxu0 0.0
    %176 = vmatpush1.msra.mxu0 0.0
    %177 = vmatprep.subr.mxu0 0.0
    %178 = vmatpush1.msra.mxu0 0.0
    %179 = vmatprep.subr.mxu0 0.0
    %180 = vmatpush1.msra.mxu0 0.0
    %181 = vmatprep.subr.mxu0 0.0
    %182 = vmatpush1.msra.mxu0 0.0
    %183 = vmatprep.subr.mxu0 0.0
    %184 = vmatpush1.msra.mxu0 0.0
    %185 = vmatprep.subr.mxu0 0.0
    %186 = vmatpush1.msra.mxu0 0.0
    %187 = vmatprep.subr.mxu0 0.0
    %188 = vmatpush1.msra.mxu0 0.0
    %189 = vmatprep.subr.mxu0 0.0
    %190 = vmatpush1.msra.mxu0 0.0
    %191 = vmatprep.subr.mxu0 0.0
    %192 = vmatpush1.msra.mxu0 0.0
    %193 = vmatprep.subr.mxu0 0.0
    %194 = vmatpush1.msra.mxu0 0.0
    %195 = vmatprep.subr.mxu0 0.0
    %196 = vmatpush1.msra.mxu0 0.0
    %197 = vmatprep.subr.mxu0 0.0
    %198 = vmatpush1.msra.mxu0 0.0
    %199 = vmatprep.subr.mxu0 0.0
    %200 = vmatpush1.msra.mxu0 0.0
    %201 = vmatprep.subr.mxu0 0.0
    %202 = vmatpush1.msra.mxu0 0.0
    %203 = vmatprep.subr.mxu0 0.0
    %204 = vmatpush1.msra.mxu0 0.0
    %205 = vmatprep.mubr.f32.mxu0 0.0
    %206 = vmatmul.mubr.f32.gmra.mrb[0].mxu0 %v136
    %v207 = vpop.f32.mrb[0].mxu0
    %v208 = vadd.f32 %v140, %v207
    %v209 = vpop.f32.mrb[0].mxu0
    %210 = vdwg.mxu0
    %v211 = vtanh.pop %v208
    %v212 = vmul.f32 %v211, 2.0
    %213 = vst [vmem:[%s2] sm:$0xff] %v212
    // Predicated region
    $region18: #{policy_forward.1} parent=1 // pred_check
      _
    $region19: #{policy_forward.1} parent=1 // pred_check_branch
      %215 = sbr.rel (0) target = $region21
    $region20: #{policy_forward.1} parent=1 // pred_region
      _
    $region21: #{policy_forward.1} parent=1 // pred_fallthru
      _
    // Predicated region
    $region22: #{policy_forward.1} parent=1 // pred_check
      _
    $region23: #{policy_forward.1} parent=1 // pred_check_branch
      %217 = sbr.rel (0) target = $region25
    $region24: #{policy_forward.1} parent=1 // pred_region
      _
    $region25: #{policy_forward.1} parent=1 // pred_fallthru
      _
    %218 = vsyncpa [#allocation3], 1
    %219 = vsyncpa [#allocation5], 1

</llo_original>
